<compile_context>
chip_gen: v6e
topology: v6e:2x2x1
jax: 0.10.0
libtpu: 0.0.40
codegen_flags: <defaults>
</compile_context>

<pallas_src>
import functools

import jax
import jax.numpy as jnp
from jax.experimental import pallas as pl
from jax.experimental.pallas import tpu as pltpu


def _round_up(n: int, m: int) -> int:
    return (n + m - 1) // m * m


def _vmem_capacity_bytes() -> int:
    """Per-core VMEM capacity; conservative 64 MiB (v7x) fallback."""
    try:
        info = pltpu.get_tpu_info()
        cap = getattr(info, "vmem_capacity_bytes", None)
        if cap:
            return int(cap)
    except Exception:
        pass
    return 64 * 1024 * 1024


def _choose_tiling(N, Dp, Hp0, xbytes, obytes, budget):
    """Returns (tm, th, nk, Hp). nk == 1 means full weights VMEM-resident."""
    tm_cap = max(8, min(512, _round_up(N, 8)))
    tm_candidates = [t for t in (512, 256, 128, 64, 32, 16, 8) if t <= tm_cap]
    if not tm_candidates:
        tm_candidates = [8]

    # b1 + b2 + gamma + beta (counted double-buffered; tiny anyway).
    small = 2 * (Hp0 * 4 + 3 * Dp * 4)

    # --- Path 1: full bf16 weights resident (hidden dim not chunked) -------
    # Weights counted at 2x (conservative: pipeline may allocate 2 buffers
    # even for a constant block index; only one HBM fetch happens either way).
    w_resident = 2 * (4 * Dp * Hp0)
    for tm in tm_candidates:
        io = 2 * tm * Dp * (xbytes + obytes)            # x/out, double-buffered
        tmp = tm * Hp0 * 6 + tm * Dp * 12               # hidden f32+bf16, epilogue temps
        if w_resident + small + io + tmp <= budget:
            return tm, Hp0, 1, Hp0

    # --- Path 2: hidden dim chunked (256-aligned for the 256x256 MXU) ------
    for tm in tm_candidates:
        io = 2 * tm * Dp * (xbytes + obytes)
        fixed = small + io + tm * Dp * (4 + 2 + 12)     # acc + bf16-x scratch + epi temps
        per_th = 8 * Dp + 8 + 6 * tm                    # W1/W2 chunks (x2 buf, bf16), b1, hidden temp
        avail = budget - fixed
        if avail <= per_th * 256:
            continue
        th = (avail // per_th) // 256 * 256
        if th < 256:
            continue
        th = min(th, _round_up(Hp0, 256))
        Hp = _round_up(Hp0, th)
        return tm, th, Hp // th, Hp

    # --- Last resort (pathologically large D vs tiny VMEM) -----------------
    tm = tm_candidates[-1]
    th = 256 if Hp0 >= 256 else Hp0
    Hp = _round_up(Hp0, th)
    return tm, th, Hp // th, Hp


def _residual_ffn_kernel(x_ref, w1_ref, b1_ref, w2_ref, b2_ref,
                         gamma_ref, beta_ref, o_ref, *scratch,
                         eps, neg_slope, inv_d, nk):
    def _finish(y_f32):
        # Residual add + LayerNorm, all in f32. Padded feature columns of x,
        # W2 output cols, b2 are exactly zero, so lane sums over Dp equal sums
        # over the real D; dividing by D gives exact nn.LayerNorm statistics.
        r = x_ref[...].astype(jnp.float32) + y_f32 + b2_ref[...]
        s = jnp.sum(r, axis=-1, keepdims=True)
        ss = jnp.sum(r * r, axis=-1, keepdims=True)
        mean = s * inv_d
        var = jnp.maximum(ss * inv_d - mean * mean, 0.0)   # clamp: cancellation safety
        norm = (r - mean) * jax.lax.rsqrt(var + eps)
        o_ref[...] = (norm * gamma_ref[...] + beta_ref[...]).astype(o_ref.dtype)

    if nk == 1:
        # Fast path: whole FFN in one shot; weights already VMEM-resident.
        xb = x_ref[...].astype(jnp.bfloat16)
        h = jnp.dot(xb, w1_ref[...], preferred_element_type=jnp.float32)
        h = h + b1_ref[...]
        h = jnp.maximum(h, neg_slope * h)                  # LeakyReLU (slope < 1)
        y = jnp.dot(h.astype(jnp.bfloat16), w2_ref[...],
                    preferred_element_type=jnp.float32)
        _finish(y)
    else:
        acc_ref, xb_ref = scratch
        k = pl.program_id(1)

        @pl.when(k == 0)
        def _():
            # Cast x to bf16 once per row tile; reused for every hidden chunk.
            xb_ref[...] = x_ref[...].astype(jnp.bfloat16)

        h = jnp.dot(xb_ref[...], w1_ref[...], preferred_element_type=jnp.float32)
        h = h + b1_ref[...]
        h = jnp.maximum(h, neg_slope * h)
        part = jnp.dot(h.astype(jnp.bfloat16), w2_ref[...],
                       preferred_element_type=jnp.float32)

        @pl.when(k == 0)
        def _():
            acc_ref[...] = part

        @pl.when(jnp.logical_and(k > 0, k < nk - 1))
        def _():
            acc_ref[...] += part

        @pl.when(k == nk - 1)
        def _():
            # Feed the last partial straight into the epilogue (no extra
            # full-tile acc store + reload).
            _finish(acc_ref[...] + part)


def residual_feed_forward(x, w1, b1, w2, b2, gamma, beta,
                          *, eps=1e-5, neg_slope=0.01):
    """x: (..., D). Returns LayerNorm(x + Linear2(LeakyReLU(Linear1(x))))."""
    orig_shape = x.shape
    D = orig_shape[-1]
    H = w1.shape[1]
    x2 = x.reshape(-1, D)
    N = x2.shape[0]

    Dp = _round_up(D, 128)
    Hp0 = _round_up(H, 128)

    cap = _vmem_capacity_bytes()
    budget = int(cap * 0.65)          # tile-sizing budget (headroom for compiler temps)
    vmem_limit = int(cap * 0.80)      # scoped VMEM limit handed to Mosaic

    xbytes = jnp.dtype(x.dtype).itemsize
    obytes = xbytes
    tm, th, nk, Hp = _choose_tiling(N, Dp, Hp0, xbytes, obytes, budget)

    # Pad feature dims only when needed (zero pads keep FFN/LayerNorm exact).
    x_in = x2 if Dp == D else jnp.pad(x2, ((0, 0), (0, Dp - D)))
    w1p = jnp.pad(w1, ((0, Dp - D), (0, Hp - H))).astype(jnp.bfloat16)
    w2p = jnp.pad(w2, ((0, Hp - H), (0, Dp - D))).astype(jnp.bfloat16)
    b1p = jnp.pad(b1, (0, Hp - H)).reshape(1, Hp).astype(jnp.float32)
    b2p = jnp.pad(b2, (0, Dp - D)).reshape(1, Dp).astype(jnp.float32)
    gp = jnp.pad(gamma, (0, Dp - D)).reshape(1, Dp).astype(jnp.float32)
    bp = jnp.pad(beta, (0, Dp - D)).reshape(1, Dp).astype(jnp.float32)

    kernel = functools.partial(_residual_ffn_kernel, eps=eps,
                               neg_slope=neg_slope, inv_d=1.0 / float(D), nk=nk)

    grid_i = pl.cdiv(N, tm)   # ragged last row tile is fine (OOB writes dropped)

    if nk == 1:
        # Weights resident: constant block index => single HBM fetch for all i.
        grid = (grid_i,)
        in_specs = [
            pl.BlockSpec((tm, Dp), lambda i: (i, 0)),    # x row tile
            pl.BlockSpec((Dp, Hp), lambda i: (0, 0)),    # W1 (resident)
            pl.BlockSpec((1, Hp), lambda i: (0, 0)),     # b1
            pl.BlockSpec((Hp, Dp), lambda i: (0, 0)),    # W2 (resident)
            pl.BlockSpec((1, Dp), lambda i: (0, 0)),     # b2
            pl.BlockSpec((1, Dp), lambda i: (0, 0)),     # gamma
            pl.BlockSpec((1, Dp), lambda i: (0, 0)),     # beta
        ]
        out_specs = pl.BlockSpec((tm, Dp), lambda i: (i, 0))
        scratch_shapes = []
        dim_sem = ("parallel",)
    else:
        # Hidden-dim chunked fallback for very large D.
        grid = (grid_i, nk)
        in_specs = [
            pl.BlockSpec((tm, Dp), lambda i, k: (i, 0)),  # x row tile
            pl.BlockSpec((Dp, th), lambda i, k: (0, k)),  # W1 chunk
            pl.BlockSpec((1, th), lambda i, k: (0, k)),   # b1 chunk
            pl.BlockSpec((th, Dp), lambda i, k: (k, 0)),  # W2 chunk
            pl.BlockSpec((1, Dp), lambda i, k: (0, 0)),   # b2
            pl.BlockSpec((1, Dp), lambda i, k: (0, 0)),   # gamma
            pl.BlockSpec((1, Dp), lambda i, k: (0, 0)),   # beta
        ]
        out_specs = pl.BlockSpec((tm, Dp), lambda i, k: (i, 0))
        scratch_shapes = [pltpu.VMEM((tm, Dp), jnp.float32),   # f32 accumulator
                          pltpu.VMEM((tm, Dp), jnp.bfloat16)]  # bf16 x (cast once)
        dim_sem = ("parallel", "arbitrary")

    out = pl.pallas_call(
        kernel,
        out_shape=jax.ShapeDtypeStruct((N, Dp), x.dtype),
        grid_spec=pltpu.PrefetchScalarGridSpec(
            num_scalar_prefetch=0,
            grid=grid,
            in_specs=in_specs,
            out_specs=out_specs,
            scratch_shapes=scratch_shapes),
        compiler_params=pltpu.CompilerParams(
            dimension_semantics=dim_sem,
            vmem_limit_bytes=vmem_limit),
    )(x_in, w1p, b1p, w2p, b2p, gp, bp)

    if Dp != D:
        out = out[:, :D]
    return out.reshape(orig_shape)


def init_params(key, embed_dim):
    """Deterministic synthetic init matching nn.Linear / nn.LayerNorm shapes."""
    hidden = 4 * embed_dim
    k1, k2, k3, k4 = jax.random.split(key, 4)
    bound1 = 1.0 / jnp.sqrt(embed_dim)
    bound2 = 1.0 / jnp.sqrt(hidden)
    # Weights stored as (in, out) = transposed PyTorch layout, so x @ W works.
    w1 = jax.random.uniform(k1, (embed_dim, hidden), jnp.float32, -bound1, bound1)
    b1 = jax.random.uniform(k2, (hidden,), jnp.float32, -bound1, bound1)
    w2 = jax.random.uniform(k3, (hidden, embed_dim), jnp.float32, -bound2, bound2)
    b2 = jax.random.uniform(k4, (embed_dim,), jnp.float32, -bound2, bound2)
    gamma = jnp.ones((embed_dim,), jnp.float32)
    beta = jnp.zeros((embed_dim,), jnp.float32)
    return w1, b1, w2, b2, gamma, beta


def _reference(x, w1, b1, w2, b2, gamma, beta, eps=1e-5, neg_slope=0.01):
    h = x @ w1 + b1
    h = jnp.where(h > 0, h, neg_slope * h)
    y = h @ w2 + b2
    r = x + y
    mean = jnp.mean(r, axis=-1, keepdims=True)
    var = jnp.mean((r - mean) ** 2, axis=-1, keepdims=True)
    return (r - mean) / jnp.sqrt(var + eps) * gamma + beta


if __name__ == "__main__":
    key = jax.random.PRNGKey(0)
    k_x, k_p = jax.random.split(key)

    batch, seq, embed_dim = 2, 8, 32
    x = jax.random.normal(k_x, (batch, seq, embed_dim), jnp.float32)
    params = init_params(k_p, embed_dim)

    out = jax.block_until_ready(residual_feed_forward(x, *params))
    ref = _reference(x, *params)

    assert out.shape == x.shape
    # Matmul operands run in bf16 (f32 accumulation + f32 residual/LayerNorm),
    # so tolerance is looser than a pure-f32 path.
    assert jnp.allclose(out, ref, atol=5e-2, rtol=5e-2), (
        f"max abs err = {jnp.max(jnp.abs(out - ref))}")
    print("KERNEL_OK")
</pallas_src>

<mosaic_0001>
module attributes {stable_mosaic.version = 11 : i64} {
  func.func @_residual_ffn_kernel(%arg0: i32, %arg1: memref<16x128xf32, #tpu.memory_space<vmem>>, %arg2: memref<128x128xbf16, #tpu.memory_space<vmem>>, %arg3: memref<1x128xf32, #tpu.memory_space<vmem>>, %arg4: memref<128x128xbf16, #tpu.memory_space<vmem>>, %arg5: memref<1x128xf32, #tpu.memory_space<vmem>>, %arg6: memref<1x128xf32, #tpu.memory_space<vmem>>, %arg7: memref<1x128xf32, #tpu.memory_space<vmem>>, %arg8: memref<16x128xf32, #tpu.memory_space<vmem>>) attributes {dimension_semantics = [#tpu.dimension_semantics<parallel>], iteration_bounds = array<i64: 1>, scalar_prefetch = 0 : i64, scratch_operands = 0 : i64, tpu.core_type = #tpu.core_type<tc>, window_params = [{transform_indices = @transform_0, window_bounds = array<i64: 16, 128>}, {pipeline_mode = #tpu.pipeline_mode<synchronous>, transform_indices = @transform_1, window_bounds = array<i64: 128, 128>}, {pipeline_mode = #tpu.pipeline_mode<synchronous>, transform_indices = @transform_2, window_bounds = array<i64: 1, 128>}, {pipeline_mode = #tpu.pipeline_mode<synchronous>, transform_indices = @transform_3, window_bounds = array<i64: 128, 128>}, {pipeline_mode = #tpu.pipeline_mode<synchronous>, transform_indices = @transform_4, window_bounds = array<i64: 1, 128>}, {pipeline_mode = #tpu.pipeline_mode<synchronous>, transform_indices = @transform_5, window_bounds = array<i64: 1, 128>}, {pipeline_mode = #tpu.pipeline_mode<synchronous>, transform_indices = @transform_6, window_bounds = array<i64: 1, 128>}, {transform_indices = @transform_7, window_bounds = array<i64: 16, 128>}]} {
    %c0 = arith.constant 0 : index
    %c0_0 = arith.constant 0 : index
    %0 = vector.load %arg1[%c0, %c0_0] : memref<16x128xf32, #tpu.memory_space<vmem>>, vector<16x128xf32>
    %1 = arith.truncf %0 : vector<16x128xf32> to vector<16x128xbf16>
    %c0_1 = arith.constant 0 : index
    %c0_2 = arith.constant 0 : index
    %2 = vector.load %arg2[%c0_1, %c0_2] : memref<128x128xbf16, #tpu.memory_space<vmem>>, vector<128x128xbf16>
    %cst = arith.constant dense<0.000000e+00> : vector<16x128xf32>
    %3 = tpu.matmul %1, %2, %cst {dimension_numbers = #tpu.dot_dimension_numbers<[1], [0], [0], [1], [0, 0, 1, 1], [], []>} : vector<16x128xbf16>, vector<128x128xbf16>, vector<16x128xf32> -> vector<16x128xf32>
    %c0_3 = arith.constant 0 : index
    %c0_4 = arith.constant 0 : index
    %4 = vector.load %arg3[%c0_3, %c0_4] : memref<1x128xf32, #tpu.memory_space<vmem>>, vector<1x128xf32>
    %5 = vector.broadcast %4 : vector<1x128xf32> to vector<16x128xf32>
    %6 = arith.addf %3, %5 : vector<16x128xf32>
    %cst_5 = arith.constant 0.00999999977 : f32
    %7 = vector.broadcast %cst_5 : f32 to vector<16x128xf32>
    %8 = arith.mulf %7, %6 : vector<16x128xf32>
    %9 = arith.maximumf %6, %8 : vector<16x128xf32>
    %10 = arith.truncf %9 : vector<16x128xf32> to vector<16x128xbf16>
    %c0_6 = arith.constant 0 : index
    %c0_7 = arith.constant 0 : index
    %11 = vector.load %arg4[%c0_6, %c0_7] : memref<128x128xbf16, #tpu.memory_space<vmem>>, vector<128x128xbf16>
    %cst_8 = arith.constant dense<0.000000e+00> : vector<16x128xf32>
    %12 = tpu.matmul %10, %11, %cst_8 {dimension_numbers = #tpu.dot_dimension_numbers<[1], [0], [0], [1], [0, 0, 1, 1], [], []>} : vector<16x128xbf16>, vector<128x128xbf16>, vector<16x128xf32> -> vector<16x128xf32>
    %c0_9 = arith.constant 0 : index
    %c0_10 = arith.constant 0 : index
    %13 = vector.load %arg1[%c0_9, %c0_10] : memref<16x128xf32, #tpu.memory_space<vmem>>, vector<16x128xf32>
    %14 = arith.addf %13, %12 : vector<16x128xf32>
    %c0_11 = arith.constant 0 : index
    %c0_12 = arith.constant 0 : index
    %15 = vector.load %arg5[%c0_11, %c0_12] : memref<1x128xf32, #tpu.memory_space<vmem>>, vector<1x128xf32>
    %16 = vector.broadcast %15 : vector<1x128xf32> to vector<16x128xf32>
    %17 = arith.addf %14, %16 : vector<16x128xf32>
    %cst_13 = arith.constant dense<0.000000e+00> : vector<16xf32>
    %18 = vector.multi_reduction <add>, %17, %cst_13 [1] : vector<16x128xf32> to vector<16xf32>
    %19 = vector.shape_cast %18 : vector<16xf32> to vector<16x1xf32>
    %20 = arith.mulf %17, %17 : vector<16x128xf32>
    %cst_14 = arith.constant dense<0.000000e+00> : vector<16xf32>
    %21 = vector.multi_reduction <add>, %20, %cst_14 [1] : vector<16x128xf32> to vector<16xf32>
    %22 = vector.shape_cast %21 : vector<16xf32> to vector<16x1xf32>
    %cst_15 = arith.constant 3.125000e-02 : f32
    %23 = vector.broadcast %cst_15 : f32 to vector<16x1xf32>
    %24 = arith.mulf %19, %23 : vector<16x1xf32>
    %cst_16 = arith.constant 3.125000e-02 : f32
    %25 = vector.broadcast %cst_16 : f32 to vector<16x1xf32>
    %26 = arith.mulf %22, %25 : vector<16x1xf32>
    %27 = arith.mulf %24, %24 : vector<16x1xf32>
    %28 = arith.subf %26, %27 : vector<16x1xf32>
    %cst_17 = arith.constant 0.000000e+00 : f32
    %29 = vector.broadcast %cst_17 : f32 to vector<16x1xf32>
    %30 = arith.maximumf %28, %29 : vector<16x1xf32>
    %31 = vector.broadcast %24 : vector<16x1xf32> to vector<16x128xf32>
    %32 = arith.subf %17, %31 : vector<16x128xf32>
    %cst_18 = arith.constant 9.99999974E-6 : f32
    %33 = vector.broadcast %cst_18 : f32 to vector<16x1xf32>
    %34 = arith.addf %30, %33 : vector<16x1xf32>
    %35 = math.rsqrt %34 : vector<16x1xf32>
    %36 = vector.broadcast %35 : vector<16x1xf32> to vector<16x128xf32>
    %37 = arith.mulf %32, %36 : vector<16x128xf32>
    %c0_19 = arith.constant 0 : index
    %c0_20 = arith.constant 0 : index
    %38 = vector.load %arg6[%c0_19, %c0_20] : memref<1x128xf32, #tpu.memory_space<vmem>>, vector<1x128xf32>
    %39 = vector.broadcast %38 : vector<1x128xf32> to vector<16x128xf32>
    %40 = arith.mulf %37, %39 : vector<16x128xf32>
    %c0_21 = arith.constant 0 : index
    %c0_22 = arith.constant 0 : index
    %41 = vector.load %arg7[%c0_21, %c0_22] : memref<1x128xf32, #tpu.memory_space<vmem>>, vector<1x128xf32>
    %42 = vector.broadcast %41 : vector<1x128xf32> to vector<16x128xf32>
    %43 = arith.addf %40, %42 : vector<16x128xf32>
    %c0_23 = arith.constant 0 : index
    %c0_24 = arith.constant 0 : index
    %44 = vector.load %arg8[%c0_23, %c0_24] : memref<16x128xf32, #tpu.memory_space<vmem>>, vector<16x128xf32>
    tpu.vector_store %arg8[%c0_23, %c0_24], %43 {strides = array<i32>} : memref<16x128xf32, #tpu.memory_space<vmem>>, vector<16x128xf32>,
    return
  }
  func.func @transform_0(%arg0: i32) -> (i32, i32) {
    %c0_i32 = arith.constant 0 : i32
    %c0_i32_0 = arith.constant 0 : i32
    return %arg0, %c0_i32 : i32, i32
  }
  func.func @transform_1(%arg0: i32) -> (i32, i32) {
    %c0_i32 = arith.constant 0 : i32
    %c0_i32_0 = arith.constant 0 : i32
    %c0_i32_1 = arith.constant 0 : i32
    return %c0_i32, %c0_i32_0 : i32, i32
  }
  func.func @transform_2(%arg0: i32) -> (i32, i32) {
    %c0_i32 = arith.constant 0 : i32
    %c0_i32_0 = arith.constant 0 : i32
    %c0_i32_1 = arith.constant 0 : i32
    return %c0_i32, %c0_i32_0 : i32, i32
  }
  func.func @transform_3(%arg0: i32) -> (i32, i32) {
    %c0_i32 = arith.constant 0 : i32
    %c0_i32_0 = arith.constant 0 : i32
    %c0_i32_1 = arith.constant 0 : i32
    return %c0_i32, %c0_i32_0 : i32, i32
  }
  func.func @transform_4(%arg0: i32) -> (i32, i32) {
    %c0_i32 = arith.constant 0 : i32
    %c0_i32_0 = arith.constant 0 : i32
    %c0_i32_1 = arith.constant 0 : i32
    return %c0_i32, %c0_i32_0 : i32, i32
  }
  func.func @transform_5(%arg0: i32) -> (i32, i32) {
    %c0_i32 = arith.constant 0 : i32
    %c0_i32_0 = arith.constant 0 : i32
    %c0_i32_1 = arith.constant 0 : i32
    return %c0_i32, %c0_i32_0 : i32, i32
  }
  func.func @transform_6(%arg0: i32) -> (i32, i32) {
    %c0_i32 = arith.constant 0 : i32
    %c0_i32_0 = arith.constant 0 : i32
    %c0_i32_1 = arith.constant 0 : i32
    return %c0_i32, %c0_i32_0 : i32, i32
  }
  func.func @transform_7(%arg0: i32) -> (i32, i32) {
    %c0_i32 = arith.constant 0 : i32
    %c0_i32_0 = arith.constant 0 : i32
    return %arg0, %c0_i32 : i32, i32
  }
}

</mosaic_0001>

<llo_original>
// kernel: tpu_custom_call.1
$region0: #{tpu_custom_call.1}
  #allocation0 [shape = 'u32[]', space=smem, size = 0x4, offset = 0x4, fixed_abs, tag = 'smem constant byte address 0x4 - core index']
  #allocation1 [shape = 'u32[144,128]{1,0:T(1,128)}', space=vmem, size = 0x12000, scoped, tag = 'internal scratch']
  %s0 = inlined_call_operand.hbm [shape: f32[16,128], index: 0, kind: input, shape index: {}]
  %s1 = inlined_call_operand.hbm [shape: bf16[128,128], index: 1, kind: input, shape index: {}]
  %s2 = inlined_call_operand.vmem [shape: f32[1,128], index: 2, kind: input, shape index: {}]
  %s3 = inlined_call_operand.hbm [shape: bf16[128,128], index: 3, kind: input, shape index: {}]
  %s4 = inlined_call_operand.vmem [shape: f32[1,128], index: 4, kind: input, shape index: {}]
  %s5 = inlined_call_operand.vmem [shape: f32[1,128], index: 5, kind: input, shape index: {}]
  %s6 = inlined_call_operand.vmem [shape: f32[1,128], index: 6, kind: input, shape index: {}]
  %s7 = inlined_call_operand.hbm [shape: f32[16,128], index: 7, kind: output, shape index: {}]
  %s8 = sld [smem:[#allocation0]]
  $region50: #{tpu_custom_call.1} parent=0
    _
  %s10 = ssub.s32 1, %s8
  %s11 = scalar_select 0, %s10, %s8
  $region1: #{tpu_custom_call.1} parent=0
    #allocation2 [shape = 'u8[8192]{0}', space=vmem, size = 0x2000, scoped, tag = 'input window, operand 0, single buffered']
    #allocation3 [shape = 's32[1]{0}', space=sflag, size = 0x4, scoped, tag = 'scoped memory for tpu_custom_call.1']
    #allocation4 [shape = 's32[1]{0}', space=sflag, size = 0x4, scoped, tag = 'scoped memory for tpu_custom_call.1']
    #allocation5 [shape = 'u8[32768]{0}', space=vmem, size = 0x8000, scoped, tag = 'input window, operand 1, single buffered']
    #allocation6 [shape = 's32[1]{0}', space=sflag, size = 0x4, scoped, tag = 'scoped memory for tpu_custom_call.1']
    #allocation7 [shape = 'u8[32768]{0}', space=vmem, size = 0x8000, scoped, tag = 'input window, operand 3, single buffered']
    #allocation8 [shape = 'u8[8192]{0}', space=vmem, size = 0x2000, scoped, tag = 'output window, operand 0, single buffered']
    %12 = vsyncpa [#allocation3], 0
    %13 = vsyncpa [#allocation6], 0
    %14 = vsyncpa [#allocation4], 0
    // Predicated region
    $region2: #{tpu_custom_call.1} parent=1 // pred_check
      _
    $region3: #{tpu_custom_call.1} parent=1 // pred_check_branch
      %16 = sbr.rel (0) target = $region5
    $region4: #{tpu_custom_call.1} parent=1 // pred_region
      %s18 = ssub.s32 256, 256
      %19 = vsyncadd [#allocation3], %s18
      %s20 = sshll.u32 [#allocation2], 4
      %s21 = int_to_ptr.vmem [resolvable:$true] %s20
      %26 = dma.hbm_to_vmem [thread:$0]  %s0, 256, %s21, [#allocation3], 128, 128, 8
    $region5: #{tpu_custom_call.1} parent=1 // pred_fallthru
      _
    // Predicated region
    $region6: #{tpu_custom_call.1} parent=1 // pred_check
      _
    $region7: #{tpu_custom_call.1} parent=1 // pred_check_branch
      %28 = sbr.rel (0) target = $region9
    $region8: #{tpu_custom_call.1} parent=1 // pred_region
      %s30 = ssub.s32 1024, 1024
      %31 = vsyncadd [#allocation6], %s30
      %s32 = sshll.u32 [#allocation5], 4
      %s33 = int_to_ptr.vmem [resolvable:$true] %s32
      %38 = dma.hbm_to_vmem [thread:$0]  %s1, 1024, %s33, [#allocation6], 64, 64, 4
    $region9: #{tpu_custom_call.1} parent=1 // pred_fallthru
      _
    // Predicated region
    $region10: #{tpu_custom_call.1} parent=1 // pred_check
      _
    $region11: #{tpu_custom_call.1} parent=1 // pred_check_branch
      %40 = sbr.rel (0) target = $region13
    $region12: #{tpu_custom_call.1} parent=1 // pred_region
      _
    $region13: #{tpu_custom_call.1} parent=1 // pred_fallthru
      _
    // Predicated region
    $region14: #{tpu_custom_call.1} parent=1 // pred_check
      _
    $region15: #{tpu_custom_call.1} parent=1 // pred_check_branch
      %42 = sbr.rel (0) target = $region17
    $region16: #{tpu_custom_call.1} parent=1 // pred_region
      %s44 = ssub.s32 1024, 1024
      %45 = vsyncadd [#allocation6], %s44
      %s46 = sshll.u32 [#allocation7], 4
      %s47 = int_to_ptr.vmem [resolvable:$true] %s46
      %52 = dma.hbm_to_vmem [thread:$0]  %s3, 1024, %s47, [#allocation6], 64, 64, 4
    $region17: #{tpu_custom_call.1} parent=1 // pred_fallthru
      _
    // Predicated region
    $region18: #{tpu_custom_call.1} parent=1 // pred_check
      _
    $region19: #{tpu_custom_call.1} parent=1 // pred_check_branch
      %54 = sbr.rel (0) target = $region21
    $region20: #{tpu_custom_call.1} parent=1 // pred_region
      _
    $region21: #{tpu_custom_call.1} parent=1 // pred_fallthru
      _
    // Predicated region
    $region22: #{tpu_custom_call.1} parent=1 // pred_check
      _
    $region23: #{tpu_custom_call.1} parent=1 // pred_check_branch
      %56 = sbr.rel (0) target = $region25
    $region24: #{tpu_custom_call.1} parent=1 // pred_region
      _
    $region25: #{tpu_custom_call.1} parent=1 // pred_fallthru
      _
    // Predicated region
    $region26: #{tpu_custom_call.1} parent=1 // pred_check
      _
    $region27: #{tpu_custom_call.1} parent=1 // pred_check_branch
      %58 = sbr.rel (0) target = $region29
    $region28: #{tpu_custom_call.1} parent=1 // pred_region
      _
    $region29: #{tpu_custom_call.1} parent=1 // pred_fallthru
      _
    // Predicated region
    $region30: #{tpu_custom_call.1} parent=1 // pred_check
      _
    $region31: #{tpu_custom_call.1} parent=1 // pred_check_branch
      %60 = sbr.rel (0) target = $region33
    $region32: #{tpu_custom_call.1} parent=1 // pred_region
      %61 = dma.done [#allocation3], 256
    $region33: #{tpu_custom_call.1} parent=1 // pred_fallthru
      _
    // Predicated region
    $region34: #{tpu_custom_call.1} parent=1 // pred_check
      _
    $region35: #{tpu_custom_call.1} parent=1 // pred_check_branch
      %63 = sbr.rel (0) target = $region37
    $region36: #{tpu_custom_call.1} parent=1 // pred_region
      %64 = dma.done [#allocation6], 1024
    $region37: #{tpu_custom_call.1} parent=1 // pred_fallthru
      _
    // Predicated region
    $region38: #{tpu_custom_call.1} parent=1 // pred_check
      _
    $region39: #{tpu_custom_call.1} parent=1 // pred_check_branch
      %66 = sbr.rel (0) target = $region41
    $region40: #{tpu_custom_call.1} parent=1 // pred_region
      %67 = dma.done [#allocation6], 1024
    $region41: #{tpu_custom_call.1} parent=1 // pred_fallthru
      _
    %v69 = vld [vmem:[#allocation2] sm:$0xff]
    %v70 = vld [vmem:[#allocation2 + $0x8] sm:$0xff]
    %v71 = vpack.c.bf16 %v70, %v69
    %v72 = vld [vmem:[#allocation5] sm:$0xf]
    %v73 = vld [vmem:[#allocation5 + $0x4] sm:$0xf]
    %v74 = vld [vmem:[#allocation5 + $0x8] sm:$0xf]
    %v75 = vld [vmem:[#allocation5 + $0xc] sm:$0xf]
    %v76 = vld [vmem:[#allocation5 + $0x10] sm:$0xf]
    %v77 = vld [vmem:[#allocation5 + $0x14] sm:$0xf]
    %v78 = vld [vmem:[#allocation5 + $0x18] sm:$0xf]
    %v79 = vld [vmem:[#allocation5 + $0x1c] sm:$0xf]
    %v80 = vld [vmem:[#allocation5 + $0x20] sm:$0xf]
    %v81 = vld [vmem:[#allocation5 + $0x24] sm:$0xf]
    %v82 = vld [vmem:[#allocation5 + $0x28] sm:$0xf]
    %v83 = vld [vmem:[#allocation5 + $0x2c] sm:$0xf]
    %v84 = vld [vmem:[#allocation5 + $0x30] sm:$0xf]
    %v85 = vld [vmem:[#allocation5 + $0x34] sm:$0xf]
    %v86 = vld [vmem:[#allocation5 + $0x38] sm:$0xf]
    %v87 = vld [vmem:[#allocation5 + $0x3c] sm:$0xf]
    %v88 = vld [vmem:[%s2] sm:$0x1]
    %v90 = vlaneseq
    %v91 = vshrl.u32 %v90, 7
    %v92 = vsub.s32 0, %v91
    %v93 = vrot.slane %v88, %v92
    %v111 = vunpack.c.l.b16 %v72
    %v112 = vunpack.c.l.b16 %v73
    %v113 = vunpack.c.l.b16 %v74
    %v114 = vunpack.c.l.b16 %v75
    %v115 = vunpack.c.l.b16 %v76
    %v116 = vunpack.c.l.b16 %v77
    %v117 = vunpack.c.l.b16 %v78
    %v118 = vunpack.c.l.b16 %v79
    %v119 = vunpack.c.l.b16 %v80
    %v120 = vunpack.c.l.b16 %v81
    %v121 = vunpack.c.l.b16 %v82
    %v122 = vunpack.c.l.b16 %v83
    %v123 = vunpack.c.l.b16 %v84
    %v124 = vunpack.c.l.b16 %v85
    %v125 = vunpack.c.l.b16 %v86
    %v126 = vunpack.c.l.b16 %v87
    %v127 = vpack.c.b16 %v112, %v111
    %v128 = vpack.c.b16 %v114, %v113
    %v129 = vpack.c.b16 %v116, %v115
    %v130 = vpack.c.b16 %v118, %v117
    %v131 = vpack.c.b16 %v120, %v119
    %v132 = vpack.c.b16 %v122, %v121
    %v133 = vpack.c.b16 %v124, %v123
    %v134 = vpack.c.b16 %v126, %v125
    %143 = vmatprep.subr.bf16.mxu0 0
    %144 = vmatpush1.bf16.msra.mxu0 %v134
    %145 = vmatprep.subr.bf16.mxu0 0
    %146 = vmatpush1.bf16.msra.mxu0 %v133
    %147 = vmatprep.subr.bf16.mxu0 0
    %148 = vmatpush1.bf16.msra.mxu0 %v132
    %149 = vmatprep.subr.bf16.mxu0 0
    %150 = vmatpush1.bf16.msra.mxu0 %v131
    %151 = vmatprep.subr.bf16.mxu0 0
    %152 = vmatpush1.bf16.msra.mxu0 %v130
    %153 = vmatprep.subr.bf16.mxu0 0
    %154 = vmatpush1.bf16.msra.mxu0 %v129
    %155 = vmatprep.subr.bf16.mxu0 0
    %156 = vmatpush1.bf16.msra.mxu0 %v128
    %157 = vmatprep.subr.bf16.mxu0 0
    %158 = vmatpush1.bf16.msra.mxu0 %v127
    %159 = vmatprep.subr.bf16.mxu0 0
    %160 = vmatpush2.bf16.msra.mxu0 0
    %161 = vmatprep.subr.bf16.mxu0 0
    %162 = vmatpush2.bf16.msra.mxu0 0
    %163 = vmatprep.subr.bf16.mxu0 0
    %164 = vmatpush2.bf16.msra.mxu0 0
    %165 = vmatprep.subr.bf16.mxu0 0
    %166 = vmatpush2.bf16.msra.mxu0 0
    %167 = vmatprep.subr.bf16.mxu0 0
    %168 = vmatpush2.bf16.msra.mxu0 0
    %169 = vmatprep.subr.bf16.mxu0 0
    %170 = vmatpush2.bf16.msra.mxu0 0
    %171 = vmatprep.subr.bf16.mxu0 0
    %172 = vmatpush2.bf16.msra.mxu0 0
    %173 = vmatprep.subr.bf16.mxu0 0
    %174 = vmatpush2.bf16.msra.mxu0 0
    %175 = vmatprep.mubr.bf16.mxu0 0
    %176 = vmatmul.mubr.bf16.gmra.mxu0 %v71
    %v177 = vpop.f32.mrf.mxu0
    %v178 = vadd.f32 %v93, %v177
    %v179 = vpop.f32.mrf.mxu0
    %v180 = vpop.f32.mrf.mxu0
    %v181 = vadd.f32 %v93, %v180
    %v182 = vpop.f32.mrf.mxu0
    %183 = vdwg.mxu0
    %v184 = vmul.f32 %v178, 0.01
    %v185 = vmul.f32 %v181, 0.01
    %v186 = vmax.f32 %v178, %v184
    %v187 = vmax.f32 %v181, %v185
    %v188 = vpack.c.bf16 %v187, %v186
    %v189 = vld [vmem:[#allocation7] sm:$0xf]
    %v190 = vld [vmem:[#allocation7 + $0x4] sm:$0xf]
    %v191 = vld [vmem:[#allocation7 + $0x8] sm:$0xf]
    %v192 = vld [vmem:[#allocation7 + $0xc] sm:$0xf]
    %v193 = vld [vmem:[#allocation7 + $0x10] sm:$0xf]
    %v194 = vld [vmem:[#allocation7 + $0x14] sm:$0xf]
    %v195 = vld [vmem:[#allocation7 + $0x18] sm:$0xf]
    %v196 = vld [vmem:[#allocation7 + $0x1c] sm:$0xf]
    %v197 = vld [vmem:[#allocation7 + $0x20] sm:$0xf]
    %v198 = vld [vmem:[#allocation7 + $0x24] sm:$0xf]
    %v199 = vld [vmem:[#allocation7 + $0x28] sm:$0xf]
    %v200 = vld [vmem:[#allocation7 + $0x2c] sm:$0xf]
    %v201 = vld [vmem:[#allocation7 + $0x30] sm:$0xf]
    %v202 = vld [vmem:[#allocation7 + $0x34] sm:$0xf]
    %v203 = vld [vmem:[#allocation7 + $0x38] sm:$0xf]
    %v204 = vld [vmem:[#allocation7 + $0x3c] sm:$0xf]
    %v221 = vunpack.c.l.b16 %v189
    %v222 = vunpack.c.l.b16 %v190
    %v223 = vunpack.c.l.b16 %v191
    %v224 = vunpack.c.l.b16 %v192
    %v225 = vunpack.c.l.b16 %v193
    %v226 = vunpack.c.l.b16 %v194
    %v227 = vunpack.c.l.b16 %v195
    %v228 = vunpack.c.l.b16 %v196
    %v229 = vunpack.c.l.b16 %v197
    %v230 = vunpack.c.l.b16 %v198
    %v231 = vunpack.c.l.b16 %v199
    %v232 = vunpack.c.l.b16 %v200
    %v233 = vunpack.c.l.b16 %v201
    %v234 = vunpack.c.l.b16 %v202
    %v235 = vunpack.c.l.b16 %v203
    %v236 = vunpack.c.l.b16 %v204
    %v237 = vpack.c.b16 %v222, %v221
    %v238 = vpack.c.b16 %v224, %v223
    %v239 = vpack.c.b16 %v226, %v225
    %v240 = vpack.c.b16 %v228, %v227
    %v241 = vpack.c.b16 %v230, %v229
    %v242 = vpack.c.b16 %v232, %v231
    %v243 = vpack.c.b16 %v234, %v233
    %v244 = vpack.c.b16 %v236, %v235
    %253 = vmatprep.subr.bf16.mxu0 0
    %254 = vmatpush1.bf16.msra.mxu0 %v244
    %255 = vmatprep.subr.bf16.mxu0 0
    %256 = vmatpush1.bf16.msra.mxu0 %v243
    %257 = vmatprep.subr.bf16.mxu0 0
    %258 = vmatpush1.bf16.msra.mxu0 %v242
    %259 = vmatprep.subr.bf16.mxu0 0
    %260 = vmatpush1.bf16.msra.mxu0 %v241
    %261 = vmatprep.subr.bf16.mxu0 0
    %262 = vmatpush1.bf16.msra.mxu0 %v240
    %263 = vmatprep.subr.bf16.mxu0 0
    %264 = vmatpush1.bf16.msra.mxu0 %v239
    %265 = vmatprep.subr.bf16.mxu0 0
    %266 = vmatpush1.bf16.msra.mxu0 %v238
    %267 = vmatprep.subr.bf16.mxu0 0
    %268 = vmatpush1.bf16.msra.mxu0 %v237
    %269 = vmatprep.subr.bf16.mxu0 0
    %270 = vmatpush2.bf16.msra.mxu0 0
    %271 = vmatprep.subr.bf16.mxu0 0
    %272 = vmatpush2.bf16.msra.mxu0 0
    %273 = vmatprep.subr.bf16.mxu0 0
    %274 = vmatpush2.bf16.msra.mxu0 0
    %275 = vmatprep.subr.bf16.mxu0 0
    %276 = vmatpush2.bf16.msra.mxu0 0
    %277 = vmatprep.subr.bf16.mxu0 0
    %278 = vmatpush2.bf16.msra.mxu0 0
    %279 = vmatprep.subr.bf16.mxu0 0
    %280 = vmatpush2.bf16.msra.mxu0 0
    %281 = vmatprep.subr.bf16.mxu0 0
    %282 = vmatpush2.bf16.msra.mxu0 0
    %283 = vmatprep.subr.bf16.mxu0 0
    %284 = vmatpush2.bf16.msra.mxu0 0
    %285 = vmatprep.mubr.bf16.mxu0 0
    %286 = vmatmul.mubr.bf16.gmra.mxu0 %v188
    %v287 = vpop.f32.mrf.mxu0
    %v288 = vadd.f32 0.0, %v287
    %v289 = vpop.f32.mrf.mxu0
    %v290 = vpop.f32.mrf.mxu0
    %v291 = vadd.f32 0.0, %v290
    %v292 = vpop.f32.mrf.mxu0
    %293 = vdwg.mxu0
    %v294 = vadd.f32 %v69, %v288
    %v295 = vadd.f32 %v70, %v291
    %v296 = vld [vmem:[%s4] sm:$0x1]
    %v298 = vlaneseq
    %v299 = vshrl.u32 %v298, 7
    %v300 = vsub.s32 0, %v299
    %v301 = vrot.slane %v296, %v300
    %v303 = vadd.f32 %v294, %v301
    %v304 = vadd.f32 %v295, %v301
    %305 = vadd.xlane.f32.xlu0 %v303
    %v306 = vpop.xlane.xlu0 %305
    %307 = vadd.xlane.f32.xlu0 %v304
    %v308 = vpop.xlane.xlu0 %307
    %v309 = vmul.f32 %v303, %v303
    %v310 = vmul.f32 %v304, %v304
    %311 = vadd.xlane.f32.xlu0 %v309
    %v312 = vpop.xlane.xlu0 %311
    %313 = vadd.xlane.f32.xlu0 %v310
    %v314 = vpop.xlane.xlu0 %313
    %v315 = vmul.f32 %v306, 0.03125
    %v316 = vmul.f32 %v308, 0.03125
    %v317 = vmul.f32 %v312, 0.03125
    %v318 = vmul.f32 %v314, 0.03125
    %v319 = vmul.f32 %v315, %v315
    %v320 = vmul.f32 %v316, %v316
    %v321 = vsub.f32 %v317, %v319
    %v322 = vsub.f32 %v318, %v320
    %v323 = vmax.f32 %v321, 0.0
    %v324 = vmax.f32 %v322, 0.0
    %v325 = vsub.f32 %v303, %v315
    %v326 = vsub.f32 %v304, %v316
    %v327 = vadd.f32 %v323, 1e-05
    %v328 = vadd.f32 %v324, 1e-05
    %v329 = vrsqrt.pop %v327
    %v330 = vrsqrt.pop %v328
    %v331 = vmul.f32 %v325, %v329
    %v332 = vmul.f32 %v326, %v330
    %v333 = vld [vmem:[%s5] sm:$0x1]
    %v335 = vlaneseq
    %v336 = vshrl.u32 %v335, 7
    %v337 = vsub.s32 0, %v336
    %v338 = vrot.slane %v333, %v337
    %v340 = vmul.f32 %v331, %v338
    %v341 = vmul.f32 %v332, %v338
    %v342 = vld [vmem:[%s6] sm:$0x1]
    %v344 = vlaneseq
    %v345 = vshrl.u32 %v344, 7
    %v346 = vsub.s32 0, %v345
    %v347 = vrot.slane %v342, %v346
    %v349 = vadd.f32 %v340, %v347
    %v350 = vadd.f32 %v341, %v347
    %351 = vst [vmem:[#allocation8] sm:$0xff] %v349
    %352 = vst [vmem:[#allocation8 + $0x8] sm:$0xff] %v350
    // Predicated region
    $region42: #{tpu_custom_call.1} parent=1 // pred_check
      _
    $region43: #{tpu_custom_call.1} parent=1 // pred_check_branch
      %354 = sbr.rel (0) target = $region45
    $region44: #{tpu_custom_call.1} parent=1 // pred_region
      %s356 = ssub.s32 256, 256
      %357 = vsyncadd [#allocation4], %s356
      %s358 = sshll.u32 [#allocation8], 4
      %s359 = int_to_ptr.vmem [resolvable:$true] %s358
      %364 = dma.vmem_to_hbm [thread:$0]  %s359, 256, %s7, [#allocation4], 128, 128, 8
    $region45: #{tpu_custom_call.1} parent=1 // pred_fallthru
      _
    // Predicated region
    $region46: #{tpu_custom_call.1} parent=1 // pred_check
      _
    $region47: #{tpu_custom_call.1} parent=1 // pred_check_branch
      %366 = sbr.rel (0) target = $region49
    $region48: #{tpu_custom_call.1} parent=1 // pred_region
      %367 = dma.done [#allocation4], 256
    $region49: #{tpu_custom_call.1} parent=1 // pred_fallthru
      _
    %368 = vsyncpa [#allocation3], 1
    %369 = vsyncpa [#allocation6], 1
    %370 = vsyncpa [#allocation4], 1

</llo_original>
